<compile_context>
chip_gen: v5e
topology: v5e:2x2
jax: 0.10.0
libtpu: 0.0.40
codegen_flags: <defaults>
</compile_context>

<pallas_src>
import jax
import jax.numpy as jnp
from jax.experimental import pallas as pl
from jax.experimental.pallas import tpu as pltpu

EPS = 1e-6


def _gemhpp_kernel(scal_ref, x_ref, pool_ref, o_ref):
    # scal_ref : SMEM (2,)          -> [p, 1/p]
    # x_ref    : VMEM [1, tc, hw]   (lane axis = hw, lane-dense)
    # pool_ref : VMEM [hw, Bt]      constant pooling matrix (1/k weights)
    # o_ref    : VMEM [1, tc, Bt]
    p = scal_ref[0]
    inv_p = scal_ref[1]

    x = x_ref[0].astype(jnp.float32)            # [tc, hw]
    x = jnp.maximum(x, EPS)                     # clamp(min=eps)
    y = jnp.exp(p * jnp.log(x))                 # x ** p   (x > 0 guaranteed)

    # One matmul = mean over every bin window of every bin size, concatenated.
    m = jnp.dot(y, pool_ref[...], preferred_element_type=jnp.float32)  # [tc, Bt]

    o_ref[0] = jnp.exp(jnp.log(m) * inv_p).astype(o_ref.dtype)         # m ** (1/p)


def _build_pool_matrix(hw, bin_num):
    """[hw, sum(bin_num)]: column (offset_b + i) averages window i of bin size b."""
    idx = jnp.arange(hw, dtype=jnp.int32)
    cols = []
    for b in bin_num:
        assert hw % b == 0, "h*w must be divisible by every bin size"
        k = hw // b
        onehot = (idx[:, None] // k) == jnp.arange(b, dtype=jnp.int32)[None, :]
        cols.append(onehot.astype(jnp.float32) * (1.0 / k))
    return jnp.concatenate(cols, axis=1)


def _pick_channel_tile(c, hw, itemsize=4, target_bytes=4 << 20):
    """Largest channel tile (divisor of c, multiple of 8) whose block <= target."""
    if c * hw * itemsize <= target_bytes:
        return c
    best = 0
    for tc in range(8, c + 1, 8):
        if c % tc == 0 and tc * hw * itemsize <= target_bytes:
            best = tc
    return best if best > 0 else c


def gem_hpp_forward(x, p_param, bin_num=(64,)):
    """
    x       : [n, c, h, w]   (float32 or bf16)
    p_param : shape (1,)     learnable GeM exponent
    returns : [n, c, sum(bin_num)]  float32
    """
    n, c, h, w = x.shape
    hw = h * w
    bt = int(sum(bin_num))

    x3 = x.reshape(n, c, hw)                                  # lane-dense layout
    pool = _build_pool_matrix(hw, bin_num)                    # [hw, bt]
    p32 = p_param.astype(jnp.float32).reshape(1)
    scal = jnp.concatenate([p32, 1.0 / p32])                  # [p, 1/p]

    tc = _pick_channel_tile(c, hw, x3.dtype.itemsize)
    assert c % tc == 0
    grid = (n, c // tc)

    kernel = pl.pallas_call(
        _gemhpp_kernel,
        out_shape=jax.ShapeDtypeStruct((n, c, bt), jnp.float32),
        grid_spec=pltpu.PrefetchScalarGridSpec(
            num_scalar_prefetch=0,
            grid=grid,
            in_specs=[
                pl.BlockSpec(memory_space=pltpu.MemorySpace.SMEM),     # [p, 1/p]
                pl.BlockSpec((1, tc, hw), lambda i, j: (i, j, 0)),     # x
                pl.BlockSpec((hw, bt), lambda i, j: (0, 0)),           # pooling mat
            ],
            out_specs=pl.BlockSpec((1, tc, bt), lambda i, j: (i, j, 0)),
        ),
        compiler_params=pltpu.CompilerParams(
            dimension_semantics=("parallel", "parallel")),
    )
    return kernel(scal, x3, pool)


def _reference(x, p_param, bin_num=(64,)):
    """Pure-JAX reference matching the PyTorch module."""
    n, c, h, w = x.shape
    p = p_param[0]
    feats = []
    for b in bin_num:
        z = x.reshape(n, c, b, (h * w) // b).astype(jnp.float32)
        z = jnp.maximum(z, EPS) ** p
        z = jnp.mean(z, axis=-1) ** (1.0 / p)
        feats.append(z)
    return jnp.concatenate(feats, axis=-1)


if __name__ == "__main__":
    key = jax.random.PRNGKey(0)
    n, c, h, w = 2, 4, 16, 16
    x = jax.random.uniform(key, (n, c, h, w), dtype=jnp.float32)

    # deterministic parameter init, as in nn.Parameter(torch.ones(1) * 6.5)
    p_param = jnp.ones((1,), dtype=jnp.float32) * 6.5

    # 1) module default bin set
    for bin_num in [(64,), (64, 16, 4, 1)]:       # default + multi-bin (fused) HPP
        out = jax.block_until_ready(gem_hpp_forward(x, p_param, bin_num))
        ref = _reference(x, p_param, bin_num)
        assert out.shape == (n, c, sum(bin_num)), (bin_num, out.shape)
        assert jnp.allclose(out, ref, rtol=1e-4, atol=1e-5), (
            bin_num, float(jnp.max(jnp.abs(out - ref))))

    print("KERNEL_OK")
</pallas_src>

<mosaic_0001>
module attributes {stable_mosaic.version = 11 : i64} {
  func.func @_gemhpp_kernel(%arg0: i32, %arg1: i32, %arg2: memref<2xf32, #tpu.memory_space<smem>>, %arg3: memref<1x4x256xf32, #tpu.memory_space<vmem>>, %arg4: memref<256x64xf32, #tpu.memory_space<vmem>>, %arg5: memref<1x4x64xf32, #tpu.memory_space<vmem>>) attributes {dimension_semantics = [#tpu.dimension_semantics<parallel>, #tpu.dimension_semantics<parallel>], iteration_bounds = array<i64: 2, 1>, scalar_prefetch = 0 : i64, scratch_operands = 0 : i64, tpu.core_type = #tpu.core_type<tc>, window_params = [{transform_indices = @transform_0, window_bounds = array<i64: 2>}, {transform_indices = @transform_1, window_bounds = array<i64: 1, 4, 256>}, {pipeline_mode = #tpu.pipeline_mode<synchronous>, transform_indices = @transform_2, window_bounds = array<i64: 256, 64>}, {transform_indices = @transform_3, window_bounds = array<i64: 1, 4, 64>}]} {
    %c0 = arith.constant 0 : index
    %0 = memref.load %arg2[%c0] : memref<2xf32, #tpu.memory_space<smem>>
    %c1 = arith.constant 1 : index
    %1 = memref.load %arg2[%c1] : memref<2xf32, #tpu.memory_space<smem>>
    %c0_0 = arith.constant 0 : index
    %c0_1 = arith.constant 0 : index
    %c0_2 = arith.constant 0 : index
    %2 = vector.load %arg3[%c0_0, %c0_1, %c0_2] : memref<1x4x256xf32, #tpu.memory_space<vmem>>, vector<1x4x256xf32>
    %3 = vector.shape_cast %2 : vector<1x4x256xf32> to vector<4x256xf32>
    %cst = arith.constant 9.99999997E-7 : f32
    %4 = vector.broadcast %cst : f32 to vector<4x256xf32>
    %5 = arith.maximumf %3, %4 : vector<4x256xf32>
    %6 = math.log %5 : vector<4x256xf32>
    %7 = vector.broadcast %0 : f32 to vector<4x256xf32>
    %8 = arith.mulf %7, %6 : vector<4x256xf32>
    %9 = math.exp %8 : vector<4x256xf32>
    %c0_3 = arith.constant 0 : index
    %c0_4 = arith.constant 0 : index
    %10 = vector.load %arg4[%c0_3, %c0_4] : memref<256x64xf32, #tpu.memory_space<vmem>>, vector<256x64xf32>
    %cst_5 = arith.constant dense<0.000000e+00> : vector<4x64xf32>
    %11 = tpu.matmul %9, %10, %cst_5 {dimension_numbers = #tpu.dot_dimension_numbers<[1], [0], [0], [1], [0, 0, 1, 1], [], []>} : vector<4x256xf32>, vector<256x64xf32>, vector<4x64xf32> -> vector<4x64xf32>
    %12 = math.log %11 : vector<4x64xf32>
    %13 = vector.broadcast %1 : f32 to vector<4x64xf32>
    %14 = arith.mulf %12, %13 : vector<4x64xf32>
    %15 = math.exp %14 : vector<4x64xf32>
    %c0_6 = arith.constant 0 : index
    %c0_7 = arith.constant 0 : index
    %c0_8 = arith.constant 0 : index
    %16 = vector.load %arg5[%c0_6, %c0_7, %c0_8] : memref<1x4x64xf32, #tpu.memory_space<vmem>>, vector<1x4x64xf32>
    %17 = vector.shape_cast %16 : vector<1x4x64xf32> to vector<4x64xf32>
    %18 = vector.shape_cast %15 : vector<4x64xf32> to vector<1x4x64xf32>
    tpu.vector_store %arg5[%c0_6, %c0_7, %c0_8], %18 {strides = array<i32>} : memref<1x4x64xf32, #tpu.memory_space<vmem>>, vector<1x4x64xf32>,
    return
  }
  func.func @transform_0(%arg0: i32, %arg1: i32) -> i32 {
    %c0_i32 = arith.constant 0 : i32
    %c0_i32_0 = arith.constant 0 : i32
    return %c0_i32 : i32
  }
  func.func @transform_1(%arg0: i32, %arg1: i32) -> (i32, i32, i32) {
    %c0_i32 = arith.constant 0 : i32
    %c0_i32_0 = arith.constant 0 : i32
    return %arg0, %arg1, %c0_i32 : i32, i32, i32
  }
  func.func @transform_2(%arg0: i32, %arg1: i32) -> (i32, i32) {
    %c0_i32 = arith.constant 0 : i32
    %c0_i32_0 = arith.constant 0 : i32
    %c0_i32_1 = arith.constant 0 : i32
    return %c0_i32, %c0_i32_0 : i32, i32
  }
  func.func @transform_3(%arg0: i32, %arg1: i32) -> (i32, i32, i32) {
    %c0_i32 = arith.constant 0 : i32
    %c0_i32_0 = arith.constant 0 : i32
    return %arg0, %arg1, %c0_i32 : i32, i32, i32
  }
}

</mosaic_0001>

<llo_original>
// kernel: tpu_custom_call.1
$region0: #{tpu_custom_call.1}
  #allocation0 [shape = 'u32[]', space=smem, size = 0x4, offset = 0x4, fixed_abs, tag = 'smem constant byte address 0x4 - core index']
  #allocation1 [shape = 'u32[72,128]{1,0:T(1,128)}', space=vmem, size = 0x9000, scoped, tag = 'internal scratch']
  %s0 = inlined_call_operand.vmem [shape: f32[2], index: 0, kind: input, shape index: {}]
  %s1 = inlined_call_operand.vmem [shape: f32[2,4,256], index: 1, kind: input, shape index: {}]
  %s2 = inlined_call_operand.vmem [shape: f32[256,64], index: 2, kind: input, shape index: {}]
  %s3 = inlined_call_operand.hbm [shape: f32[2,4,64], index: 3, kind: output, shape index: {}]
  %s4 = sld [smem:[#allocation0]]
  $region49: #{tpu_custom_call.1} parent=0
    _
  %s6 = ssub.s32 1, %s4
  %s7 = scalar_select 0, %s6, %s4
  $region1: #{tpu_custom_call.1} parent=0
    #allocation2 [shape = 'u8[512]{0}', space=smem, size = 0x200, scoped, tag = 'input window, operand 0, single buffered']
    #allocation3 [shape = 's32[2]{0}', space=sflag, size = 0x8, scoped, tag = 'scoped memory for tpu_custom_call.1']
    #allocation4 [shape = 's32[2]{0}', space=sflag, size = 0x8, scoped, tag = 'scoped memory for tpu_custom_call.1']
    #allocation5 [shape = 'u8[4096]{0}', space=vmem, size = 0x1000, scoped, tag = 'output window, operand 0']
    %8 = vsyncpa [#allocation4], 0
    %9 = vsyncpa [#allocation3], 0
    %s10 = scalar_lea.sflag [#allocation3], 1
    %11 = vsyncpa %s10, 0
    loop: start=0, step=1, limit=4
    $region2: #{tpu_custom_call.1} parent=1 // loop_pre_header
      _
    $region3: #{tpu_custom_call.1} parent=1 // loop_header
      %s13 = sphi 0, %s17
      %p14 = scmp.ge.s32.totalorder %s13, 4
      %s20 = sphi 0, %s32
      %s21 = sphi 0, %s28
      %s22 = sphi 0, %s20
      %s23 = sphi 0, %s21
      %s24 = sphi 0, %s22
      %s25 = sphi 0, %s23
      %s33 = sphi 0, %s33
      %s35 = sphi 0, %s33
      %s36 = sphi 0, %s35
      %s50 = sphi 0, %s36
      %s58 = sphi 0, %s60
      %s61 = sphi 0, %s58
      %s62 = sphi 0, %s61
      %s78 = sphi 0, %s62
      %s82 = sphi 0, %s82
      %s84 = sphi 0, %s82
      %s85 = sphi 0, %s84
      %s99 = sphi 0, %s85
      %s107 = sphi 0, %s109
      %s110 = sphi 0, %s107
      %s111 = sphi 0, %s110
      %s127 = sphi 0, %s111
    $region4: #{tpu_custom_call.1} parent=1 // loop_header_branch
      %16 = sbr.rel (%p14) target = $region8
    $region5: #{tpu_custom_call.1} parent=1 // loop_body
      %s18 = ssub.s32 %s13, 1
      %s19 = ssub.s32 %s13, 2
      %s26 = sadd.s32 1, %s21
      %p27 = scmp.ge.s32.totalorder %s26, 1
      %s28 = scalar_select %p27, 0, %s26
      %s29 = sadd.s32 1, %s20
      %s30 = scalar_select %p27, %s29, %s20
      %p31 = scmp.ge.s32.totalorder %s30, 2
      %s32 = scalar_select %p31, 0, %s30
      %s34 = sadd.s32 %s33, 1
      %p37 = scmp.eq.s32.totalorder %s13, 1
      %p38 = scmp.ne.s32.totalorder %s33, %s35
      %p39 = scmp.eq.s32.totalorder %s13, 0
      %p40 = por %p38, %p39
      %p41 = scmp.ne.s32.totalorder %s33, %s35
      %p42 = scmp.eq.s32.totalorder %s18, 1
      %p43 = por %p41, %p42
      %p44 = scmp.ne.s32.totalorder %s35, %s36
      %p45 = scmp.eq.s32.totalorder %s18, 0
      %p46 = por %p44, %p45
      %p47 = scmp.ne.s32.totalorder %s35, %s36
      %p48 = scmp.eq.s32.totalorder %s19, 1
      %p49 = por %p47, %p48
      %p51 = scmp.ne.s32.totalorder %s36, %s50
      %p52 = scmp.eq.s32.totalorder %s19, 0
      %p53 = por %p51, %p52
      %s54 = ssub.s32 %s20, %s32
      %s55 = ssub.s32 %s21, %s28
      %s56 = sor.u32 %s54, %s55
      %p57 = scmp.eq.s32.totalorder %s56, 0
      %s59 = sadd.s32 %s58, 1
      %s60 = scalar_select %p57, %s58, %s59
      %p63 = pneg %p57
      %p64 = scmp.eq.s32.totalorder %s13, 1
      %p65 = por %p63, %p64
      %p66 = scmp.ne.s32.totalorder %s58, %s61
      %p67 = scmp.eq.s32.totalorder %s13, 0
      %p68 = por %p66, %p67
      %p69 = scmp.ne.s32.totalorder %s58, %s61
      %p70 = scmp.eq.s32.totalorder %s18, 1
      %p71 = por %p69, %p70
      %p72 = scmp.ne.s32.totalorder %s61, %s62
      %p73 = scmp.eq.s32.totalorder %s18, 0
      %p74 = por %p72, %p73
      %p75 = scmp.ne.s32.totalorder %s61, %s62
      %p76 = scmp.eq.s32.totalorder %s19, 1
      %p77 = por %p75, %p76
      %p79 = scmp.ne.s32.totalorder %s62, %s78
      %p80 = scmp.eq.s32.totalorder %s19, 0
      %p81 = por %p79, %p80
      %s83 = sadd.s32 %s82, 1
      %p86 = scmp.eq.s32.totalorder %s13, 1
      %p87 = scmp.ne.s32.totalorder %s82, %s84
      %p88 = scmp.eq.s32.totalorder %s13, 0
      %p89 = por %p87, %p88
      %p90 = scmp.ne.s32.totalorder %s82, %s84
      %p91 = scmp.eq.s32.totalorder %s18, 1
      %p92 = por %p90, %p91
      %p93 = scmp.ne.s32.totalorder %s84, %s85
      %p94 = scmp.eq.s32.totalorder %s18, 0
      %p95 = por %p93, %p94
      %p96 = scmp.ne.s32.totalorder %s84, %s85
      %p97 = scmp.eq.s32.totalorder %s19, 1
      %p98 = por %p96, %p97
      %p100 = scmp.ne.s32.totalorder %s85, %s99
      %p101 = scmp.eq.s32.totalorder %s19, 0
      %p102 = por %p100, %p101
      %s103 = ssub.s32 %s20, %s32
      %s104 = ssub.s32 %s21, %s28
      %s105 = sor.u32 %s103, %s104
      %p106 = scmp.eq.s32.totalorder %s105, 0
      %s108 = sadd.s32 %s107, 1
      %s109 = scalar_select %p106, %s107, %s108
      %p112 = pneg %p106
      %p113 = scmp.eq.s32.totalorder %s13, 1
      %p114 = por %p112, %p113
      %p115 = scmp.ne.s32.totalorder %s107, %s110
      %p116 = scmp.eq.s32.totalorder %s13, 0
      %p117 = por %p115, %p116
      %p118 = scmp.ne.s32.totalorder %s107, %s110
      %p119 = scmp.eq.s32.totalorder %s18, 1
      %p120 = por %p118, %p119
      %p121 = scmp.ne.s32.totalorder %s110, %s111
      %p122 = scmp.eq.s32.totalorder %s18, 0
      %p123 = por %p121, %p122
      %p124 = scmp.ne.s32.totalorder %s110, %s111
      %p125 = scmp.eq.s32.totalorder %s19, 1
      %p126 = por %p124, %p125
      %p128 = scmp.ne.s32.totalorder %s111, %s127
      %p129 = scmp.eq.s32.totalorder %s19, 0
      %p130 = por %p128, %p129
      %p131 = scmp.le.s32.totalorder 1, %s13
      %p132 = scmp.lt.s32.totalorder %s13, 3
      %p133 = pnand %p131, %p132
      %p134 = pneg %p133
      // Predicated region
      $region9: #{tpu_custom_call.1} parent=5 // pred_check
        _
      $region10: #{tpu_custom_call.1} parent=5 // pred_check_branch
        %136 = sbr.rel (%p133) target = $region12
      $region11: #{tpu_custom_call.1} parent=5 // pred_region
        %s137 = ssub.s32 %s13, 1
        // Predicated region
        $region13: #{tpu_custom_call.1} parent=11 // pred_check
          %p138 = pneg %p46
        $region14: #{tpu_custom_call.1} parent=11 // pred_check_branch
          %140 = sbr.rel (%p138) target = $region16
        $region15: #{tpu_custom_call.1} parent=11 // pred_region
          %142 = vsyncadd [#allocation4], 0
          %s144 = sshll.u32 %s0, 4
          %s145 = int_to_ptr.vmem [resolvable:$true] %s144
          %147 = dma.vmem_to_smem %s145, 16, [#allocation2], [#allocation4]
        $region16: #{tpu_custom_call.1} parent=11 // pred_fallthru
          _
        // Predicated region
        $region17: #{tpu_custom_call.1} parent=11 // pred_check
          %p148 = pneg %p95
        $region18: #{tpu_custom_call.1} parent=11 // pred_check_branch
          %150 = sbr.rel (%p148) target = $region20
        $region19: #{tpu_custom_call.1} parent=11 // pred_region
          _
        $region20: #{tpu_custom_call.1} parent=11 // pred_fallthru
          _
      $region12: #{tpu_custom_call.1} parent=5 // pred_fallthru
        _
      %p151 = scmp.lt.s32.totalorder %s13, 2
      // Predicated region
      $region21: #{tpu_custom_call.1} parent=5 // pred_check
        %p152 = pneg %p151
      $region22: #{tpu_custom_call.1} parent=5 // pred_check_branch
        %154 = sbr.rel (%p152) target = $region24
      $region23: #{tpu_custom_call.1} parent=5 // pred_region
        // Predicated region
        $region25: #{tpu_custom_call.1} parent=23 // pred_check
          %p155 = pneg %p68
        $region26: #{tpu_custom_call.1} parent=23 // pred_check_branch
          %157 = sbr.rel (%p155) target = $region28
        $region27: #{tpu_custom_call.1} parent=23 // pred_region
          %p158 = scmp.lt.s32.totalorder %s20, 1
          %s159 = scalar_select %p158, %s20, 1
          %p160 = scmp.lt.s32.totalorder %s21, 0
          %s161 = scalar_select %p160, %s21, 0
          %s162 = smul.addr %s161, 2
          %s163 = smul.addr %s159, 2
          %s164 = sadd.s32 %s162, %s163
          %s165 = smul.addr %s164, 4
          %s166 = scalar_lea.vmem %s1, %s165
        $region28: #{tpu_custom_call.1} parent=23 // pred_fallthru
          _
      $region24: #{tpu_custom_call.1} parent=5 // pred_fallthru
        _
      %p167 = scmp.le.s32.totalorder 1, %s13
      %p168 = scmp.lt.s32.totalorder %s13, 3
      %p169 = pnand %p167, %p168
      %p170 = pneg %p169
      // Predicated region
      $region29: #{tpu_custom_call.1} parent=5 // pred_check
        _
      $region30: #{tpu_custom_call.1} parent=5 // pred_check_branch
        %172 = sbr.rel (%p169) target = $region32
      $region31: #{tpu_custom_call.1} parent=5 // pred_region
        %s173 = ssub.s32 %s13, 1
        // Predicated region
        $region33: #{tpu_custom_call.1} parent=31 // pred_check
          %p174 = pneg %p46
        $region34: #{tpu_custom_call.1} parent=31 // pred_check_branch
          %176 = sbr.rel (%p174) target = $region36
        $region35: #{tpu_custom_call.1} parent=31 // pred_region
          %178 = dma.done [#allocation4], 16
        $region36: #{tpu_custom_call.1} parent=31 // pred_fallthru
          _
        %179 = sfence
        %p180 = pneg %p46
        %p181 = pneg %p43
        %p182 = scmp.lt.s32.totalorder %s22, 1
        %s183 = scalar_select %p182, %s22, 1
        %p184 = scmp.lt.s32.totalorder %s23, 0
        %s185 = scalar_select %p184, %s23, 0
        %s186 = smul.addr %s185, 2
        %s187 = smul.addr %s183, 2
        %s188 = sadd.s32 %s186, %s187
        %s189 = smul.addr %s188, 4
        %s190 = scalar_lea.vmem %s1, %s189
        %p191 = pneg %p74
        %p192 = pneg %p71
        %p193 = pneg %p95
        %p194 = pneg %p92
        %p195 = pneg %p123
        %p196 = pneg %p120
        %s197 = sand.u32 %s110, 1
        %s198 = scalar_lea.sflag [#allocation3], %s197
        %s199 = sand.u32 %s110, 1
        %s200 = smul.addr %s199, 4
        %s201 = scalar_lea.vmem [#allocation5], %s200
        %p202 = scmp.lt.s32.totalorder %s22, 1
        %s203 = scalar_select %p202, %s22, 1
        %p204 = scmp.lt.s32.totalorder %s23, 0
        %s205 = scalar_select %p204, %s23, 0
        %s206 = smul.addr %s205, 2
        %s207 = smul.addr %s203, 2
        %s208 = sadd.s32 %s206, %s207
        %s209 = smul.addr %s208, 4
        %s210 = scalar_lea.vmem %s1, %s209
        %s211 = sld [smem:[#allocation2]]
        %s212 = sld [smem:[#allocation2 + $0x1]]
        %v213 = vld [vmem:[%s210] sm:$0xff]
        %v214 = vmax.f32 %v213, 1e-06
        %v215 = vlog2.pop %v214
        %v216 = vmul.f32 %v215, 0.6931472
        %v217 = vstv %s211
        %v218 = vmul.f32 %v217, %v216
        %v219 = vmul.f32 %v218, 1.442695
        %v220 = vpow.pop %v219
        %v221 = vld [vmem:[%s2] sm:$0xff]
        %v222 = vld [vmem:[%s2 + $0x8] sm:$0xff]
        %v223 = vld [vmem:[%s2 + $0x10] sm:$0xff]
        %v224 = vld [vmem:[%s2 + $0x18] sm:$0xff]
        %v225 = vld [vmem:[%s2 + $0x20] sm:$0xff]
        %v226 = vld [vmem:[%s2 + $0x28] sm:$0xff]
        %v227 = vld [vmem:[%s2 + $0x30] sm:$0xff]
        %v228 = vld [vmem:[%s2 + $0x38] sm:$0xff]
        %v229 = vld [vmem:[%s2 + $0x40] sm:$0xff]
        %v230 = vld [vmem:[%s2 + $0x48] sm:$0xff]
        %v231 = vld [vmem:[%s2 + $0x50] sm:$0xff]
        %v232 = vld [vmem:[%s2 + $0x58] sm:$0xff]
        %v233 = vld [vmem:[%s2 + $0x60] sm:$0xff]
        %v234 = vld [vmem:[%s2 + $0x68] sm:$0xff]
        %v235 = vld [vmem:[%s2 + $0x70] sm:$0xff]
        %v236 = vld [vmem:[%s2 + $0x78] sm:$0xff]
        %v237 = vld [vmem:[%s2 + $0x80] sm:$0xff]
        %v238 = vld [vmem:[%s2 + $0x88] sm:$0xff]
        %v239 = vld [vmem:[%s2 + $0x90] sm:$0xff]
        %v240 = vld [vmem:[%s2 + $0x98] sm:$0xff]
        %v241 = vld [vmem:[%s2 + $0xa0] sm:$0xff]
        %v242 = vld [vmem:[%s2 + $0xa8] sm:$0xff]
        %v243 = vld [vmem:[%s2 + $0xb0] sm:$0xff]
        %v244 = vld [vmem:[%s2 + $0xb8] sm:$0xff]
        %v245 = vld [vmem:[%s2 + $0xc0] sm:$0xff]
        %v246 = vld [vmem:[%s2 + $0xc8] sm:$0xff]
        %v247 = vld [vmem:[%s2 + $0xd0] sm:$0xff]
        %v248 = vld [vmem:[%s2 + $0xd8] sm:$0xff]
        %v249 = vld [vmem:[%s2 + $0xe0] sm:$0xff]
        %v250 = vld [vmem:[%s2 + $0xe8] sm:$0xff]
        %v251 = vld [vmem:[%s2 + $0xf0] sm:$0xff]
        %v252 = vld [vmem:[%s2 + $0xf8] sm:$0xff]
        %254 = vst [vmem:[#allocation1] ss:$2 sm:$0xff] %v220
        %v255 = vld.sshfl [vmem:[#allocation1] sm:$0xff pattern:$0x75316420]
        %v256 = vld.sshfl [vmem:[#allocation1 + $0x8] sm:$0xff pattern:$0x75316420]
        %259 = vmatpush.msra.mxu0 %v236
        %260 = vmatpush.msra.mxu0 %v235
        %261 = vmatpush.msra.mxu0 %v234
        %262 = vmatpush.msra.mxu0 %v233
        %263 = vmatpush.msra.mxu0 %v232
        %264 = vmatpush.msra.mxu0 %v231
        %265 = vmatpush.msra.mxu0 %v230
        %266 = vmatpush.msra.mxu0 %v229
        %267 = vmatpush.msra.mxu0 %v228
        %268 = vmatpush.msra.mxu0 %v227
        %269 = vmatpush.msra.mxu0 %v226
        %270 = vmatpush.msra.mxu0 %v225
        %271 = vmatpush.msra.mxu0 %v224
        %272 = vmatpush.msra.mxu0 %v223
        %273 = vmatpush.msra.mxu0 %v222
        %274 = vmatpush.msra.mxu0 %v221
        %275 = vmatmul.f32.gmra.mxu0 %v255
        %v276 = vpop.f32.mrf.mxu0
        %v277 = vadd.f32 0.0, %v276
        %278 = vdwg.mxu0
        %279 = vmatpush.msra.mxu0 %v252
        %280 = vmatpush.msra.mxu0 %v251
        %281 = vmatpush.msra.mxu0 %v250
        %282 = vmatpush.msra.mxu0 %v249
        %283 = vmatpush.msra.mxu0 %v248
        %284 = vmatpush.msra.mxu0 %v247
        %285 = vmatpush.msra.mxu0 %v246
        %286 = vmatpush.msra.mxu0 %v245
        %287 = vmatpush.msra.mxu0 %v244
        %288 = vmatpush.msra.mxu0 %v243
        %289 = vmatpush.msra.mxu0 %v242
        %290 = vmatpush.msra.mxu0 %v241
        %291 = vmatpush.msra.mxu0 %v240
        %292 = vmatpush.msra.mxu0 %v239
        %293 = vmatpush.msra.mxu0 %v238
        %294 = vmatpush.msra.mxu0 %v237
        %295 = vmatmul.f32.gmra.mxu0 %v256
        %v296 = vpop.f32.mrf.mxu0
        %v297 = vadd.f32 %v277, %v296
        %298 = vdwg.mxu0
        %v299 = vlog2.pop %v297
        %v300 = vmul.f32 %v299, 0.6931472
        %v301 = vstv %s212
        %v302 = vmul.f32 %v300, %v301
        %v303 = vmul.f32 %v302, 1.442695
        %v304 = vpow.pop %v303
        %vm305 = vcmask 519168
        %306 = vst.msk [vmem:[%s201] sm:$0xf] %vm305, %v304
        %s307 = sand.u32 %s110, 1
        %s308 = scalar_lea.sflag [#allocation3], %s307
        %s309 = sand.u32 %s110, 1
        %s310 = smul.addr %s309, 4
        %s311 = scalar_lea.vmem [#allocation5], %s310
        // Predicated region
        $region37: #{tpu_custom_call.1} parent=31 // pred_check
          %p312 = pneg %p120
        $region38: #{tpu_custom_call.1} parent=31 // pred_check_branch
          %314 = sbr.rel (%p312) target = $region40
        $region39: #{tpu_custom_call.1} parent=31 // pred_region
          %316 = vsyncadd %s308, 0
          %s317 = sadd.s32 %s23, %s22
          %s318 = smul.addr %s317, 4
          %s319 = scalar_lea.hbm %s3, %s318
          %s321 = sshll.u32 %s311, 4
          %s322 = int_to_ptr.vmem [resolvable:$true] %s321
          %s323 = sshll.u32 %s319, 4
          %s324 = int_to_ptr.hbm [resolvable:$true] %s323
          %326 = dma.vmem_to_hbm [thread:$0]  %s322, 64, %s324, %s308
        $region40: #{tpu_custom_call.1} parent=31 // pred_fallthru
          _
      $region32: #{tpu_custom_call.1} parent=5 // pred_fallthru
        _
      %p327 = scmp.le.s32.totalorder 2, %s13
      // Predicated region
      $region41: #{tpu_custom_call.1} parent=5 // pred_check
        %p328 = pneg %p327
      $region42: #{tpu_custom_call.1} parent=5 // pred_check_branch
        %330 = sbr.rel (%p328) target = $region44
      $region43: #{tpu_custom_call.1} parent=5 // pred_region
        %s331 = ssub.s32 %s13, 2
        // Predicated region
        $region45: #{tpu_custom_call.1} parent=43 // pred_check
          %p332 = pneg %p126
        $region46: #{tpu_custom_call.1} parent=43 // pred_check_branch
          %334 = sbr.rel (%p332) target = $region48
        $region47: #{tpu_custom_call.1} parent=43 // pred_region
          %s335 = sand.u32 %s111, 1
          %s336 = scalar_lea.sflag [#allocation3], %s335
          %s337 = sand.u32 %s111, 1
          %s338 = smul.addr %s337, 4
          %s339 = scalar_lea.vmem [#allocation5], %s338
          %341 = dma.done %s336, 64
        $region48: #{tpu_custom_call.1} parent=43 // pred_fallthru
          _
      $region44: #{tpu_custom_call.1} parent=5 // pred_fallthru
        _
    $region6: #{tpu_custom_call.1} parent=1 // loop_footer
      %s17 = sadd.s32 1, %s13
    $region7: #{tpu_custom_call.1} parent=1 // loop_footer_branch
      %12 = sbr.rel target = $region3
    $region8: #{tpu_custom_call.1} parent=1 // loop_exit
      _
    %342 = vsyncpa [#allocation3], 1
    %s343 = scalar_lea.sflag [#allocation3], 1
    %344 = vsyncpa %s343, 1
    %345 = vsyncpa [#allocation4], 1
    %s346 = scalar_lea.sflag [#allocation4], 1
    %347 = vsyncpa %s346, 1

</llo_original>
